<compile_context>
chip_gen: v5e
topology: v5e:2x2
jax: 0.10.0
libtpu: 0.0.40
codegen_flags: <defaults>
</compile_context>

<pallas_src>
import jax
import jax.numpy as jnp
from jax.experimental import pallas as pl
from jax.experimental.pallas import tpu as pltpu


def linreg_kernel(x_ref, w_ref, b_ref, o_ref):
    # y[i] = sum_f x[i, f] * w[0, f] + b
    # O == 1, so this is a VPU elementwise multiply + row reduce; the MXU and
    # the in-kernel transpose of w are skipped entirely.
    x = x_ref[...]                  # (TB, F) f32, streamed per grid step
    w = w_ref[...]                  # (1, F)  f32, resident across the grid
    b = b_ref[0, 0]                 # scalar bias from SMEM (scalar-slot add)
    y = jnp.sum(x * w, axis=-1, keepdims=True) + b   # (TB, 1) f32
    o_ref[...] = y.astype(o_ref.dtype)


def linear_regression(x, weight, bias, *, block_batch=512):
    """x: (B, F) f32, weight: (1, F) f32, bias: (1,) f32 -> (B, 1) f32."""
    B, F = x.shape
    O = weight.shape[0]
    assert O == 1, "kernel is specialized to out_features == 1"

    # Batch tile: full batch when small, otherwise 512 rows (divisible by 8 for
    # the sublane rule; F is the full last dim so the lane rule is satisfied).
    # With F=4 a double-buffered 512-row f32 tile is tiny, so it fits the
    # default scoped VMEM on every generation incl. v7x's 64 MiB — no
    # vmem_limit_bytes override needed.
    tb = B if B <= block_batch else block_batch
    grid = (pl.cdiv(B, tb),)

    bias_smem = bias.reshape(1, 1).astype(jnp.float32)

    return pl.pallas_call(
        linreg_kernel,
        out_shape=jax.ShapeDtypeStruct((B, O), jnp.float32),
        grid=grid,
        in_specs=[
            # x: streamed batch tiles, auto double-buffered by Pallas.
            pl.BlockSpec((tb, F), lambda i: (i, 0)),
            # weight: same (only) block for every grid step -> VMEM-resident.
            pl.BlockSpec((O, F), lambda i: (0, 0)),
            # bias: whole (1,1) array lives in SMEM, no padded VMEM tile.
            pl.BlockSpec(memory_space=pltpu.MemorySpace.SMEM),
        ],
        out_specs=pl.BlockSpec((tb, O), lambda i: (i, 0)),
        compiler_params=pltpu.CompilerParams(
            # Batch tiles are independent: shard across TCs on v7x megacore.
            dimension_semantics=("parallel",),
        ),
    )(x, weight, bias_smem)


if __name__ == "__main__":
    input_features = 4
    batch = 8

    key = jax.random.PRNGKey(0)
    kx, kw, kb = jax.random.split(key, 3)

    # Deterministic init mimicking nn.Linear default: U(-1/sqrt(F), 1/sqrt(F))
    bound = 1.0 / (input_features ** 0.5)
    weight = jax.random.uniform(kw, (1, input_features), jnp.float32, -bound, bound)
    bias = jax.random.uniform(kb, (1,), jnp.float32, -bound, bound)

    x = jax.random.normal(kx, (batch, input_features), jnp.float32)

    out = jax.block_until_ready(linear_regression(x, weight, bias))

    # Reference check in plain JAX (same semantics as nn.Linear forward).
    ref = x @ weight.T + bias
    assert out.shape == (batch, 1)
    assert jnp.allclose(out, ref, atol=1e-5, rtol=1e-5)

    print("KERNEL_OK")
</pallas_src>

<mosaic_0001>
module attributes {stable_mosaic.version = 11 : i64} {
  func.func @linreg_kernel(%arg0: i32, %arg1: memref<8x4xf32, #tpu.memory_space<vmem>>, %arg2: memref<1x4xf32, #tpu.memory_space<vmem>>, %arg3: memref<1x1xf32, #tpu.memory_space<smem>>, %arg4: memref<8x1xf32, #tpu.memory_space<vmem>>) attributes {dimension_semantics = [#tpu.dimension_semantics<parallel>], iteration_bounds = array<i64: 1>, scalar_prefetch = 0 : i64, scratch_operands = 0 : i64, tpu.core_type = #tpu.core_type<tc>, window_params = [{transform_indices = @transform_0, window_bounds = array<i64: 8, 4>}, {pipeline_mode = #tpu.pipeline_mode<synchronous>, transform_indices = @transform_1, window_bounds = array<i64: 1, 4>}, {transform_indices = @transform_2, window_bounds = array<i64: 1, 1>}, {transform_indices = @transform_3, window_bounds = array<i64: 8, 1>}]} {
    %c0 = arith.constant 0 : index
    %c0_0 = arith.constant 0 : index
    %0 = vector.load %arg1[%c0, %c0_0] : memref<8x4xf32, #tpu.memory_space<vmem>>, vector<8x4xf32>
    %c0_1 = arith.constant 0 : index
    %c0_2 = arith.constant 0 : index
    %1 = vector.load %arg2[%c0_1, %c0_2] : memref<1x4xf32, #tpu.memory_space<vmem>>, vector<1x4xf32>
    %c0_3 = arith.constant 0 : index
    %c0_4 = arith.constant 0 : index
    %2 = memref.load %arg3[%c0_3, %c0_4] : memref<1x1xf32, #tpu.memory_space<smem>>
    %3 = vector.broadcast %1 : vector<1x4xf32> to vector<8x4xf32>
    %4 = arith.mulf %0, %3 : vector<8x4xf32>
    %cst = arith.constant dense<0.000000e+00> : vector<8xf32>
    %5 = vector.multi_reduction <add>, %4, %cst [1] : vector<8x4xf32> to vector<8xf32>
    %6 = vector.shape_cast %5 : vector<8xf32> to vector<8x1xf32>
    %7 = vector.broadcast %2 : f32 to vector<8x1xf32>
    %8 = arith.addf %6, %7 : vector<8x1xf32>
    %c0_5 = arith.constant 0 : index
    %c0_6 = arith.constant 0 : index
    %9 = vector.load %arg4[%c0_5, %c0_6] : memref<8x1xf32, #tpu.memory_space<vmem>>, vector<8x1xf32>
    tpu.vector_store %arg4[%c0_5, %c0_6], %8 {strides = array<i32>} : memref<8x1xf32, #tpu.memory_space<vmem>>, vector<8x1xf32>,
    return
  }
  func.func @transform_0(%arg0: i32) -> (i32, i32) {
    %c0_i32 = arith.constant 0 : i32
    %c0_i32_0 = arith.constant 0 : i32
    return %arg0, %c0_i32 : i32, i32
  }
  func.func @transform_1(%arg0: i32) -> (i32, i32) {
    %c0_i32 = arith.constant 0 : i32
    %c0_i32_0 = arith.constant 0 : i32
    %c0_i32_1 = arith.constant 0 : i32
    return %c0_i32, %c0_i32_0 : i32, i32
  }
  func.func @transform_2(%arg0: i32) -> (i32, i32) {
    %c0_i32 = arith.constant 0 : i32
    %c0_i32_0 = arith.constant 0 : i32
    %c0_i32_1 = arith.constant 0 : i32
    return %c0_i32, %c0_i32_0 : i32, i32
  }
  func.func @transform_3(%arg0: i32) -> (i32, i32) {
    %c0_i32 = arith.constant 0 : i32
    %c0_i32_0 = arith.constant 0 : i32
    return %arg0, %c0_i32 : i32, i32
  }
}

</mosaic_0001>

<llo_original>
// kernel: tpu_custom_call.1
$region0: #{tpu_custom_call.1}
  #allocation0 [shape = 'u32[]', space=smem, size = 0x4, offset = 0x4, fixed_abs, tag = 'smem constant byte address 0x4 - core index']
  #allocation1 [shape = 'u32[72,128]{1,0:T(1,128)}', space=vmem, size = 0x9000, scoped, tag = 'internal scratch']
  #allocation2 [shape = 'f32[1,1]{1,0:T(1,128)S(6)}', space=smem, size = 0x200, scoped, tag = 'scoped memory for tpu_custom_call.1']
  %s0 = inlined_call_operand.vmem [shape: f32[8,4], index: 0, kind: input, shape index: {}]
  %s1 = inlined_call_operand.vmem [shape: f32[1,4], index: 1, kind: input, shape index: {}]
  %s2 = inlined_call_operand.<no memory space> [shape: f32[1,1], index: 2, kind: input, shape index: {}]
  %s3 = inlined_call_operand.vmem [shape: f32[8,1], index: 3, kind: output, shape index: {}]
  %s4 = sld [smem:[#allocation0]]
  $region22: #{tpu_custom_call.1} parent=0
    _
  %s6 = ssub.s32 1, %s4
  %s7 = scalar_select 0, %s6, %s4
  %8 = sst [smem:[#allocation2]] %s2
  // Predicated region
  $region2: #{tpu_custom_call.1} parent=0 // pred_check
    _
  $region3: #{tpu_custom_call.1} parent=0 // pred_check_branch
    %10 = sbr.rel (0) target = $region5
  $region4: #{tpu_custom_call.1} parent=0 // pred_region
    _
  $region5: #{tpu_custom_call.1} parent=0 // pred_fallthru
    _
  // Predicated region
  $region6: #{tpu_custom_call.1} parent=0 // pred_check
    _
  $region7: #{tpu_custom_call.1} parent=0 // pred_check_branch
    %12 = sbr.rel (0) target = $region9
  $region8: #{tpu_custom_call.1} parent=0 // pred_region
    _
  $region9: #{tpu_custom_call.1} parent=0 // pred_fallthru
    _
  // Predicated region
  $region10: #{tpu_custom_call.1} parent=0 // pred_check
    _
  $region11: #{tpu_custom_call.1} parent=0 // pred_check_branch
    %14 = sbr.rel (0) target = $region13
  $region12: #{tpu_custom_call.1} parent=0 // pred_region
    _
  $region13: #{tpu_custom_call.1} parent=0 // pred_fallthru
    _
  %v15 = vld [vmem:[%s0] sm:$0xff]
  %v16 = vld [vmem:[%s1] sm:$0x1]
  %s17 = sld [smem:[#allocation2]]
  %v19 = vperm.slane %v16, 0
  %v21 = vmul.f32 %v15, %v19
  %vm22 = vcmask 31744
  %v23 = vsel %vm22, %v21, 0.0
  %24 = vadd.xlane.f32.xlu0 %v23
  %v25 = vpop.xlane.xlu0 %24
  %v26 = vstv %s17
  %v27 = vadd.f32 %v25, %v26
  %vm28 = vcmask 7168
  %29 = vst.msk [vmem:[%s3] sm:$0xff] %vm28, %v27
  // Predicated region
  $region14: #{tpu_custom_call.1} parent=0 // pred_check
    _
  $region15: #{tpu_custom_call.1} parent=0 // pred_check_branch
    %31 = sbr.rel (0) target = $region17
  $region16: #{tpu_custom_call.1} parent=0 // pred_region
    _
  $region17: #{tpu_custom_call.1} parent=0 // pred_fallthru
    _
  // Predicated region
  $region18: #{tpu_custom_call.1} parent=0 // pred_check
    _
  $region19: #{tpu_custom_call.1} parent=0 // pred_check_branch
    %33 = sbr.rel (0) target = $region21
  $region20: #{tpu_custom_call.1} parent=0 // pred_region
    _
  $region21: #{tpu_custom_call.1} parent=0 // pred_fallthru
    _

</llo_original>
